<compile_context>
chip_gen: v6e
topology: v6e:2x2x1
jax: 0.10.0
libtpu: 0.0.40
codegen_flags: <defaults>
</compile_context>

<pallas_src>
import jax
import jax.numpy as jnp
from jax.experimental import pallas as pl
from jax.experimental.pallas import tpu as pltpu


def _round_up(a, m):
    return (a + m - 1) // m * m


def cheb_global_pool_kernel(x_ref, w0_ref, b0_ref, batch_ref, wl_ref,
                            inv_cnt_ref, bl_ref, out_ref, acc_ref):
    # x_ref:       [TN, C_in]   bf16 node-feature tile
    # w0_ref:      [C_in, H]    bf16 ChebConv Theta_0 (transposed Linear weight)
    # b0_ref:      [1, H]       f32 ChebConv bias
    # batch_ref:   [1, TN]      int32 graph id per node (padded nodes -> B_pad sentinel)
    # wl_ref:      [H, 1]       f32 final Linear weight (transposed)
    # inv_cnt_ref: [B_pad, 1]   f32 1 / max(per-graph node count, 1)
    # bl_ref:      [1, 1]       f32 final Linear bias (SMEM scalar)
    # out_ref:     [B_pad, 128] f32 sigmoid output, broadcast along lanes
    # acc_ref:     [B_pad, 128] f32 running per-graph segment sums of (h @ wl)
    step = pl.program_id(0)

    @pl.when(step == 0)
    def _init():
        acc_ref[...] = jnp.zeros_like(acc_ref)

    # ChebConv K=1: x @ Theta_0 (bf16 MXU, f32 accumulate) + bias, then ReLU (f32 VPU).
    h = jnp.dot(x_ref[...], w0_ref[...], preferred_element_type=jnp.float32)
    h = jnp.maximum(h + b0_ref[...], 0.0)                       # [TN, H] f32

    # Final Linear applied before pooling (mean and Linear commute).
    s = jnp.dot(h, wl_ref[...], preferred_element_type=jnp.float32)   # [TN, 1]

    # Segment-sum of s by graph id via a tiny one-hot matmul.
    b_pad = acc_ref.shape[0]
    tn = x_ref.shape[0]
    gid = jax.lax.broadcasted_iota(jnp.int32, (b_pad, tn), 0)    # [B_pad, TN]
    assign = (gid == batch_ref[...]).astype(jnp.float32)         # padded nodes match nothing
    contrib = jnp.dot(assign, s, preferred_element_type=jnp.float32)  # [B_pad, 1]
    acc_ref[...] += contrib                                      # broadcast along lanes

    @pl.when(step == pl.num_programs(0) - 1)
    def _finalize():
        logits = acc_ref[...] * inv_cnt_ref[...] + bl_ref[0, 0]  # [B_pad, 128]
        sig = pl.reciprocal(1.0 + jnp.exp(-logits), approx=True)
        out_ref[...] = sig.astype(out_ref.dtype)


def cheb_global_pooling(x, batch, w0, b0, wl, bl, num_graphs, tn=512):
    # tn: node-tile size. 512 rows double-buffered in bf16 is tiny relative to
    # VMEM on all generations (v7x 64 MiB, v5e/v6e 128 MiB); raise it for very
    # wide C_in if profiling shows the DMA exposed.
    N, c_in = x.shape
    H = w0.shape[1]

    tn = min(tn, _round_up(N, 128))          # TN must be a multiple of 128 (batch tile)
    n_pad = _round_up(N, tn)
    b_pad = _round_up(max(num_graphs, 1), 8)

    # bf16 node features / Theta_0 for the main matmul; pad N with zero rows and an
    # out-of-range graph id so padded nodes contribute nothing.
    x_p = jnp.zeros((n_pad, c_in), jnp.bfloat16).at[:N].set(x.astype(jnp.bfloat16))
    batch_p = jnp.full((1, n_pad), b_pad, jnp.int32).at[0, :N].set(batch.astype(jnp.int32))

    # Precompute per-graph node-count reciprocals outside the kernel.
    counts = jnp.zeros((b_pad,), jnp.float32).at[batch].add(1.0)
    inv_counts = (1.0 / jnp.maximum(counts, 1.0)).reshape(b_pad, 1)

    w0_b = w0.astype(jnp.bfloat16)
    b0_2d = b0.reshape(1, H).astype(jnp.float32)
    wl_2d = wl.reshape(H, 1).astype(jnp.float32)
    bl_2d = bl.reshape(1, 1).astype(jnp.float32)

    grid = (n_pad // tn,)
    flops = 2 * n_pad * c_in * H + 2 * n_pad * H + 2 * b_pad * n_pad
    bytes_accessed = (n_pad * c_in * 2 + c_in * H * 2 + n_pad * 4
                      + b_pad * 128 * 4 + (H + b_pad + 1) * 4)

    out = pl.pallas_call(
        cheb_global_pool_kernel,
        out_shape=jax.ShapeDtypeStruct((b_pad, 128), jnp.float32),
        grid_spec=pltpu.PrefetchScalarGridSpec(
            num_scalar_prefetch=0,
            grid=grid,
            in_specs=[
                pl.BlockSpec((tn, c_in), lambda i: (i, 0)),     # x tiles (streamed)
                pl.BlockSpec((c_in, H), lambda i: (0, 0)),      # Theta_0 (resident)
                pl.BlockSpec((1, H), lambda i: (0, 0)),         # b0
                pl.BlockSpec((1, tn), lambda i: (0, i)),        # batch ids (streamed)
                pl.BlockSpec((H, 1), lambda i: (0, 0)),         # wl
                pl.BlockSpec((b_pad, 1), lambda i: (0, 0)),     # 1/counts
                pl.BlockSpec(memory_space=pltpu.MemorySpace.SMEM),  # bl scalar
            ],
            out_specs=pl.BlockSpec((b_pad, 128), lambda i: (0, 0)),
            scratch_shapes=[pltpu.VMEM((b_pad, 128), jnp.float32)],
        ),
        compiler_params=pltpu.CompilerParams(
            dimension_semantics=("arbitrary",),                 # N is a reduction axis
            vmem_limit_bytes=32 * 1024 * 1024,
        ),
        cost_estimate=pl.CostEstimate(
            flops=flops,
            transcendentals=b_pad * 128,
            bytes_accessed=bytes_accessed,
        ),
    )(x_p, w0_b, b0_2d, batch_p, wl_2d, inv_counts, bl_2d)

    return out[:num_graphs, :1]


def reference(x, batch, w0, b0, wl, bl, num_graphs):
    h = jnp.maximum(x @ w0 + b0, 0.0)
    one_hot = (jnp.arange(num_graphs)[:, None] == batch[None, :]).astype(jnp.float32)
    counts = one_hot.sum(axis=1, keepdims=True)
    pooled = (one_hot @ h) / jnp.maximum(counts, 1.0)
    logits = pooled @ wl.reshape(-1, 1) + bl
    return jax.nn.sigmoid(logits)


if __name__ == "__main__":
    # Small shapes consistent with the forward pass:
    #   N nodes, C_in input features, H hidden channels, B graphs.
    # N=300 with tn=128 exercises the multi-step reduction grid (init / accumulate / finalize).
    N, C_IN, HID, B = 300, 16, 32, 3

    key = jax.random.PRNGKey(0)
    k_x, k_w0, k_b0, k_wl, k_bl = jax.random.split(key, 5)

    x = jax.random.normal(k_x, (N, C_IN), dtype=jnp.float32)
    # sorted batch assignment (PyG convention): 100 / 120 / 80 nodes per graph
    batch = jnp.concatenate([
        jnp.zeros(100, jnp.int32),
        jnp.ones(120, jnp.int32),
        jnp.full((80,), 2, jnp.int32),
    ])

    # Deterministic parameter init (ChebConv Theta_0 + bias, Linear weight + bias)
    w0 = jax.random.normal(k_w0, (C_IN, HID), dtype=jnp.float32) * 0.1
    b0 = jax.random.normal(k_b0, (HID,), dtype=jnp.float32) * 0.1
    wl = jax.random.normal(k_wl, (HID, 1), dtype=jnp.float32) * 0.1
    bl = jax.random.normal(k_bl, (1,), dtype=jnp.float32) * 0.1

    out = cheb_global_pooling(x, batch, w0, b0, wl, bl, num_graphs=B, tn=128)
    out = jax.block_until_ready(out)

    ref = reference(x, batch, w0, b0, wl, bl, num_graphs=B)
    assert out.shape == (B, 1)
    # bf16 x@W0 + approx reciprocal in the kernel vs pure-f32 reference -> loose tolerance.
    assert jnp.allclose(out, ref, atol=1e-2, rtol=1e-2), (out, ref)
    print("KERNEL_OK")
</pallas_src>

<mosaic_0001>
module attributes {stable_mosaic.version = 11 : i64} {
  func.func @cheb_global_pool_kernel(%arg0: i32, %arg1: memref<128x16xbf16, #tpu.memory_space<vmem>>, %arg2: memref<16x32xbf16, #tpu.memory_space<vmem>>, %arg3: memref<1x32xf32, #tpu.memory_space<vmem>>, %arg4: memref<1x128xi32, #tpu.memory_space<vmem>>, %arg5: memref<32x1xf32, #tpu.memory_space<vmem>>, %arg6: memref<8x1xf32, #tpu.memory_space<vmem>>, %arg7: memref<1x1xf32, #tpu.memory_space<smem>>, %arg8: memref<8x128xf32, #tpu.memory_space<vmem>>, %arg9: memref<8x128xf32, #tpu.memory_space<vmem>>) attributes {dimension_semantics = [#tpu.dimension_semantics<arbitrary>], iteration_bounds = array<i64: 3>, scalar_prefetch = 0 : i64, scratch_operands = 1 : i64, tpu.core_type = #tpu.core_type<tc>, window_params = [{transform_indices = @transform_0, window_bounds = array<i64: 128, 16>}, {pipeline_mode = #tpu.pipeline_mode<synchronous>, transform_indices = @transform_1, window_bounds = array<i64: 16, 32>}, {pipeline_mode = #tpu.pipeline_mode<synchronous>, transform_indices = @transform_2, window_bounds = array<i64: 1, 32>}, {transform_indices = @transform_3, window_bounds = array<i64: 1, 128>}, {pipeline_mode = #tpu.pipeline_mode<synchronous>, transform_indices = @transform_4, window_bounds = array<i64: 32, 1>}, {pipeline_mode = #tpu.pipeline_mode<synchronous>, transform_indices = @transform_5, window_bounds = array<i64: 8, 1>}, {transform_indices = @transform_6, window_bounds = array<i64: 1, 1>}, {pipeline_mode = #tpu.pipeline_mode<synchronous>, transform_indices = @transform_7, window_bounds = array<i64: 8, 128>}]} {
    %c0_i32 = arith.constant 0 : i32
    %0 = arith.cmpi eq, %arg0, %c0_i32 : i32
    %1 = arith.extui %0 : i1 to i32
    %c0_i32_0 = arith.constant 0 : i32
    %2 = arith.cmpi ne, %1, %c0_i32_0 : i32
    scf.if %2 {
      %cst_18 = arith.constant 0.000000e+00 : f32
      %27 = vector.broadcast %cst_18 : f32 to vector<8x128xf32>
      %c0_19 = arith.constant 0 : index
      %c0_20 = arith.constant 0 : index
      %28 = vector.load %arg9[%c0_19, %c0_20] : memref<8x128xf32, #tpu.memory_space<vmem>>, vector<8x128xf32>
      tpu.vector_store %arg9[%c0_19, %c0_20], %27 {strides = array<i32>} : memref<8x128xf32, #tpu.memory_space<vmem>>, vector<8x128xf32>,
    } else {
    }
    %c0 = arith.constant 0 : index
    %c0_1 = arith.constant 0 : index
    %3 = vector.load %arg1[%c0, %c0_1] : memref<128x16xbf16, #tpu.memory_space<vmem>>, vector<128x16xbf16>
    %c0_2 = arith.constant 0 : index
    %c0_3 = arith.constant 0 : index
    %4 = vector.load %arg2[%c0_2, %c0_3] : memref<16x32xbf16, #tpu.memory_space<vmem>>, vector<16x32xbf16>
    %cst = arith.constant dense<0.000000e+00> : vector<128x32xf32>
    %5 = tpu.matmul %3, %4, %cst {dimension_numbers = #tpu.dot_dimension_numbers<[1], [0], [0], [1], [0, 0, 1, 1], [], []>} : vector<128x16xbf16>, vector<16x32xbf16>, vector<128x32xf32> -> vector<128x32xf32>
    %c0_4 = arith.constant 0 : index
    %c0_5 = arith.constant 0 : index
    %6 = vector.load %arg3[%c0_4, %c0_5] : memref<1x32xf32, #tpu.memory_space<vmem>>, vector<1x32xf32>
    %7 = vector.broadcast %6 : vector<1x32xf32> to vector<128x32xf32>
    %8 = arith.addf %5, %7 : vector<128x32xf32>
    %cst_6 = arith.constant 0.000000e+00 : f32
    %9 = vector.broadcast %cst_6 : f32 to vector<128x32xf32>
    %10 = arith.maximumf %8, %9 : vector<128x32xf32>
    %c0_7 = arith.constant 0 : index
    %c0_8 = arith.constant 0 : index
    %11 = vector.load %arg5[%c0_7, %c0_8] : memref<32x1xf32, #tpu.memory_space<vmem>>, vector<32x1xf32>
    %cst_9 = arith.constant dense<0.000000e+00> : vector<128x1xf32>
    %12 = tpu.matmul %10, %11, %cst_9 {dimension_numbers = #tpu.dot_dimension_numbers<[1], [0], [0], [1], [0, 0, 1, 1], [], []>} : vector<128x32xf32>, vector<32x1xf32>, vector<128x1xf32> -> vector<128x1xf32>
    %13 = tpu.iota {dimensions = array<i32: 0>} : vector<8x128xi32>
    %c0_10 = arith.constant 0 : index
    %c0_11 = arith.constant 0 : index
    %14 = vector.load %arg4[%c0_10, %c0_11] : memref<1x128xi32, #tpu.memory_space<vmem>>, vector<1x128xi32>
    %15 = vector.broadcast %14 : vector<1x128xi32> to vector<8x128xi32>
    %16 = arith.cmpi eq, %13, %15 : vector<8x128xi32>
    %17 = arith.extui %16 : vector<8x128xi1> to vector<8x128xi32>
    %18 = arith.sitofp %17 : vector<8x128xi32> to vector<8x128xf32>
    %cst_12 = arith.constant dense<0.000000e+00> : vector<8x1xf32>
    %19 = tpu.matmul %18, %12, %cst_12 {dimension_numbers = #tpu.dot_dimension_numbers<[1], [0], [0], [1], [0, 0, 1, 1], [], []>} : vector<8x128xf32>, vector<128x1xf32>, vector<8x1xf32> -> vector<8x1xf32>
    %c0_13 = arith.constant 0 : index
    %c0_14 = arith.constant 0 : index
    %20 = vector.load %arg9[%c0_13, %c0_14] : memref<8x128xf32, #tpu.memory_space<vmem>>, vector<8x128xf32>
    %21 = vector.broadcast %19 : vector<8x1xf32> to vector<8x128xf32>
    %22 = arith.addf %20, %21 : vector<8x128xf32>
    %c0_15 = arith.constant 0 : index
    %c0_16 = arith.constant 0 : index
    %23 = vector.load %arg9[%c0_15, %c0_16] : memref<8x128xf32, #tpu.memory_space<vmem>>, vector<8x128xf32>
    tpu.vector_store %arg9[%c0_15, %c0_16], %22 {strides = array<i32>} : memref<8x128xf32, #tpu.memory_space<vmem>>, vector<8x128xf32>,
    %c2_i32 = arith.constant 2 : i32
    %24 = arith.cmpi eq, %arg0, %c2_i32 : i32
    %25 = arith.extui %24 : i1 to i32
    %c0_i32_17 = arith.constant 0 : i32
    %26 = arith.cmpi ne, %25, %c0_i32_17 : i32
    scf.if %26 {
      %c0_18 = arith.constant 0 : index
      %c0_19 = arith.constant 0 : index
      %27 = vector.load %arg9[%c0_18, %c0_19] : memref<8x128xf32, #tpu.memory_space<vmem>>, vector<8x128xf32>
      %c0_20 = arith.constant 0 : index
      %c0_21 = arith.constant 0 : index
      %28 = vector.load %arg6[%c0_20, %c0_21] : memref<8x1xf32, #tpu.memory_space<vmem>>, vector<8x1xf32>
      %29 = vector.broadcast %28 : vector<8x1xf32> to vector<8x128xf32>
      %30 = arith.mulf %27, %29 : vector<8x128xf32>
      %c0_22 = arith.constant 0 : index
      %c0_23 = arith.constant 0 : index
      %31 = memref.load %arg7[%c0_22, %c0_23] : memref<1x1xf32, #tpu.memory_space<smem>>
      %32 = vector.broadcast %31 : f32 to vector<8x128xf32>
      %33 = arith.addf %30, %32 : vector<8x128xf32>
      %cst_24 = arith.constant 0.000000e+00 : f32
      %34 = vector.broadcast %cst_24 : f32 to vector<8x128xf32>
      %35 = arith.subf %34, %33 : vector<8x128xf32>
      %36 = math.exp %35 : vector<8x128xf32>
      %cst_25 = arith.constant 1.000000e+00 : f32
      %37 = vector.broadcast %cst_25 : f32 to vector<8x128xf32>
      %38 = arith.addf %37, %36 : vector<8x128xf32>
      %39 = tpu.reciprocal %38 {approx = true} : vector<8x128xf32> -> vector<8x128xf32>
      %c0_26 = arith.constant 0 : index
      %c0_27 = arith.constant 0 : index
      %40 = vector.load %arg8[%c0_26, %c0_27] : memref<8x128xf32, #tpu.memory_space<vmem>>, vector<8x128xf32>
      tpu.vector_store %arg8[%c0_26, %c0_27], %39 {strides = array<i32>} : memref<8x128xf32, #tpu.memory_space<vmem>>, vector<8x128xf32>,
    } else {
    }
    return
  }
  func.func @transform_0(%arg0: i32) -> (i32, i32) {
    %c0_i32 = arith.constant 0 : i32
    %c0_i32_0 = arith.constant 0 : i32
    return %arg0, %c0_i32 : i32, i32
  }
  func.func @transform_1(%arg0: i32) -> (i32, i32) {
    %c0_i32 = arith.constant 0 : i32
    %c0_i32_0 = arith.constant 0 : i32
    %c0_i32_1 = arith.constant 0 : i32
    return %c0_i32, %c0_i32_0 : i32, i32
  }
  func.func @transform_2(%arg0: i32) -> (i32, i32) {
    %c0_i32 = arith.constant 0 : i32
    %c0_i32_0 = arith.constant 0 : i32
    %c0_i32_1 = arith.constant 0 : i32
    return %c0_i32, %c0_i32_0 : i32, i32
  }
  func.func @transform_3(%arg0: i32) -> (i32, i32) {
    %c0_i32 = arith.constant 0 : i32
    %c0_i32_0 = arith.constant 0 : i32
    return %c0_i32, %arg0 : i32, i32
  }
  func.func @transform_4(%arg0: i32) -> (i32, i32) {
    %c0_i32 = arith.constant 0 : i32
    %c0_i32_0 = arith.constant 0 : i32
    %c0_i32_1 = arith.constant 0 : i32
    return %c0_i32, %c0_i32_0 : i32, i32
  }
  func.func @transform_5(%arg0: i32) -> (i32, i32) {
    %c0_i32 = arith.constant 0 : i32
    %c0_i32_0 = arith.constant 0 : i32
    %c0_i32_1 = arith.constant 0 : i32
    return %c0_i32, %c0_i32_0 : i32, i32
  }
  func.func @transform_6(%arg0: i32) -> (i32, i32) {
    %c0_i32 = arith.constant 0 : i32
    %c0_i32_0 = arith.constant 0 : i32
    %c0_i32_1 = arith.constant 0 : i32
    return %c0_i32, %c0_i32_0 : i32, i32
  }
  func.func @transform_7(%arg0: i32) -> (i32, i32) {
    %c0_i32 = arith.constant 0 : i32
    %c0_i32_0 = arith.constant 0 : i32
    %c0_i32_1 = arith.constant 0 : i32
    return %c0_i32, %c0_i32_0 : i32, i32
  }
}

</mosaic_0001>

<llo_original>
// kernel: tpu_custom_call.1
$region0: #{tpu_custom_call.1}
  #allocation0 [shape = 'u32[]', space=smem, size = 0x4, offset = 0x4, fixed_abs, tag = 'smem constant byte address 0x4 - core index']
  #allocation1 [shape = 'u32[144,128]{1,0:T(1,128)}', space=vmem, size = 0x12000, scoped, tag = 'internal scratch']
  #allocation2 [shape = 'f32[8,128]{1,0:T(8,128)}', space=vmem, size = 0x1000, scoped, tag = 'scratch operand']
  #allocation3 [shape = 'f32[1,1]{1,0:T(1,128)S(6)}', space=smem, size = 0x200, scoped, tag = 'scoped memory for tpu_custom_call.1']
  %s0 = inlined_call_operand.vmem [shape: bf16[384,16], index: 0, kind: input, shape index: {}]
  %s1 = inlined_call_operand.vmem [shape: bf16[16,32], index: 1, kind: input, shape index: {}]
  %s2 = inlined_call_operand.vmem [shape: f32[1,32], index: 2, kind: input, shape index: {}]
  %s3 = inlined_call_operand.vmem [shape: s32[1,384], index: 3, kind: input, shape index: {}]
  %s4 = inlined_call_operand.vmem [shape: f32[32,1], index: 4, kind: input, shape index: {}]
  %s5 = inlined_call_operand.vmem [shape: f32[8,1], index: 5, kind: input, shape index: {}]
  %s6 = inlined_call_operand.<no memory space> [shape: f32[1,1], index: 6, kind: input, shape index: {}]
  %s7 = inlined_call_operand.hbm [shape: f32[8,128], index: 7, kind: output, shape index: {}]
  %s8 = sld [smem:[#allocation0]]
  $region69: #{tpu_custom_call.1} parent=0
    _
  %s10 = ssub.s32 1, %s8
  %s11 = scalar_select 0, %s10, %s8
  %12 = sst [smem:[#allocation3]] %s6
  $region1: #{tpu_custom_call.1} parent=0
    #allocation4 [shape = 'u8[4096]{0}', space=vmem, size = 0x1000, scoped, tag = 'output window, operand 0, single buffered']
    #allocation5 [shape = 's32[2]{0}', space=sflag, size = 0x8, scoped, tag = 'scoped memory for tpu_custom_call.1']
    %13 = vsyncpa [#allocation5], 0
    loop: start=0, step=1, limit=5
    $region2: #{tpu_custom_call.1} parent=1 // loop_pre_header
      _
    $region3: #{tpu_custom_call.1} parent=1 // loop_header
      %s15 = sphi 0, %s19
      %p16 = scmp.ge.s32.totalorder %s15, 5
      %s25 = sphi 0, %s27
      %s28 = sphi 0, %s25
      %s29 = sphi 0, %s28
      %s45 = sphi 0, %s29
      %s49 = sphi 0, %s49
      %s51 = sphi 0, %s49
      %s52 = sphi 0, %s51
      %s66 = sphi 0, %s52
      %s70 = sphi 0, %s70
      %s72 = sphi 0, %s70
      %s73 = sphi 0, %s72
      %s87 = sphi 0, %s73
      %s93 = sphi 0, %s95
      %s96 = sphi 0, %s93
      %s97 = sphi 0, %s96
      %s113 = sphi 0, %s97
      %s117 = sphi 0, %s117
      %s119 = sphi 0, %s117
      %s120 = sphi 0, %s119
      %s134 = sphi 0, %s120
      %s138 = sphi 0, %s138
      %s140 = sphi 0, %s138
      %s141 = sphi 0, %s140
      %s155 = sphi 0, %s141
      %s159 = sphi 0, %s159
      %s161 = sphi 0, %s159
      %s162 = sphi 0, %s161
      %s176 = sphi 0, %s162
      %s180 = sphi 0, %s180
      %s182 = sphi 0, %s180
      %s183 = sphi 0, %s182
      %s197 = sphi 0, %s183
    $region4: #{tpu_custom_call.1} parent=1 // loop_header_branch
      %18 = sbr.rel (%p16) target = $region8
    $region5: #{tpu_custom_call.1} parent=1 // loop_body
      %s20 = ssub.s32 %s15, 1
      %s21 = ssub.s32 %s15, 2
      %s22 = sadd.s32 %s15, 1
      %s23 = ssub.s32 %s15, %s22
      %p24 = scmp.eq.s32.totalorder %s23, 0
      %s26 = sadd.s32 %s25, 1
      %s27 = scalar_select %p24, %s25, %s26
      %p30 = pneg %p24
      %p31 = scmp.eq.s32.totalorder %s15, 2
      %p32 = por %p30, %p31
      %p33 = scmp.ne.s32.totalorder %s25, %s28
      %p34 = scmp.eq.s32.totalorder %s15, 0
      %p35 = por %p33, %p34
      %p36 = scmp.ne.s32.totalorder %s25, %s28
      %p37 = scmp.eq.s32.totalorder %s20, 2
      %p38 = por %p36, %p37
      %p39 = scmp.ne.s32.totalorder %s28, %s29
      %p40 = scmp.eq.s32.totalorder %s20, 0
      %p41 = por %p39, %p40
      %p42 = scmp.ne.s32.totalorder %s28, %s29
      %p43 = scmp.eq.s32.totalorder %s21, 2
      %p44 = por %p42, %p43
      %p46 = scmp.ne.s32.totalorder %s29, %s45
      %p47 = scmp.eq.s32.totalorder %s21, 0
      %p48 = por %p46, %p47
      %s50 = sadd.s32 %s49, 1
      %p53 = scmp.eq.s32.totalorder %s15, 2
      %p54 = scmp.ne.s32.totalorder %s49, %s51
      %p55 = scmp.eq.s32.totalorder %s15, 0
      %p56 = por %p54, %p55
      %p57 = scmp.ne.s32.totalorder %s49, %s51
      %p58 = scmp.eq.s32.totalorder %s20, 2
      %p59 = por %p57, %p58
      %p60 = scmp.ne.s32.totalorder %s51, %s52
      %p61 = scmp.eq.s32.totalorder %s20, 0
      %p62 = por %p60, %p61
      %p63 = scmp.ne.s32.totalorder %s51, %s52
      %p64 = scmp.eq.s32.totalorder %s21, 2
      %p65 = por %p63, %p64
      %p67 = scmp.ne.s32.totalorder %s52, %s66
      %p68 = scmp.eq.s32.totalorder %s21, 0
      %p69 = por %p67, %p68
      %s71 = sadd.s32 %s70, 1
      %p74 = scmp.eq.s32.totalorder %s15, 2
      %p75 = scmp.ne.s32.totalorder %s70, %s72
      %p76 = scmp.eq.s32.totalorder %s15, 0
      %p77 = por %p75, %p76
      %p78 = scmp.ne.s32.totalorder %s70, %s72
      %p79 = scmp.eq.s32.totalorder %s20, 2
      %p80 = por %p78, %p79
      %p81 = scmp.ne.s32.totalorder %s72, %s73
      %p82 = scmp.eq.s32.totalorder %s20, 0
      %p83 = por %p81, %p82
      %p84 = scmp.ne.s32.totalorder %s72, %s73
      %p85 = scmp.eq.s32.totalorder %s21, 2
      %p86 = por %p84, %p85
      %p88 = scmp.ne.s32.totalorder %s73, %s87
      %p89 = scmp.eq.s32.totalorder %s21, 0
      %p90 = por %p88, %p89
      %s91 = ssub.s32 %s15, %s22
      %p92 = scmp.eq.s32.totalorder %s91, 0
      %s94 = sadd.s32 %s93, 1
      %s95 = scalar_select %p92, %s93, %s94
      %p98 = pneg %p92
      %p99 = scmp.eq.s32.totalorder %s15, 2
      %p100 = por %p98, %p99
      %p101 = scmp.ne.s32.totalorder %s93, %s96
      %p102 = scmp.eq.s32.totalorder %s15, 0
      %p103 = por %p101, %p102
      %p104 = scmp.ne.s32.totalorder %s93, %s96
      %p105 = scmp.eq.s32.totalorder %s20, 2
      %p106 = por %p104, %p105
      %p107 = scmp.ne.s32.totalorder %s96, %s97
      %p108 = scmp.eq.s32.totalorder %s20, 0
      %p109 = por %p107, %p108
      %p110 = scmp.ne.s32.totalorder %s96, %s97
      %p111 = scmp.eq.s32.totalorder %s21, 2
      %p112 = por %p110, %p111
      %p114 = scmp.ne.s32.totalorder %s97, %s113
      %p115 = scmp.eq.s32.totalorder %s21, 0
      %p116 = por %p114, %p115
      %s118 = sadd.s32 %s117, 1
      %p121 = scmp.eq.s32.totalorder %s15, 2
      %p122 = scmp.ne.s32.totalorder %s117, %s119
      %p123 = scmp.eq.s32.totalorder %s15, 0
      %p124 = por %p122, %p123
      %p125 = scmp.ne.s32.totalorder %s117, %s119
      %p126 = scmp.eq.s32.totalorder %s20, 2
      %p127 = por %p125, %p126
      %p128 = scmp.ne.s32.totalorder %s119, %s120
      %p129 = scmp.eq.s32.totalorder %s20, 0
      %p130 = por %p128, %p129
      %p131 = scmp.ne.s32.totalorder %s119, %s120
      %p132 = scmp.eq.s32.totalorder %s21, 2
      %p133 = por %p131, %p132
      %p135 = scmp.ne.s32.totalorder %s120, %s134
      %p136 = scmp.eq.s32.totalorder %s21, 0
      %p137 = por %p135, %p136
      %s139 = sadd.s32 %s138, 1
      %p142 = scmp.eq.s32.totalorder %s15, 2
      %p143 = scmp.ne.s32.totalorder %s138, %s140
      %p144 = scmp.eq.s32.totalorder %s15, 0
      %p145 = por %p143, %p144
      %p146 = scmp.ne.s32.totalorder %s138, %s140
      %p147 = scmp.eq.s32.totalorder %s20, 2
      %p148 = por %p146, %p147
      %p149 = scmp.ne.s32.totalorder %s140, %s141
      %p150 = scmp.eq.s32.totalorder %s20, 0
      %p151 = por %p149, %p150
      %p152 = scmp.ne.s32.totalorder %s140, %s141
      %p153 = scmp.eq.s32.totalorder %s21, 2
      %p154 = por %p152, %p153
      %p156 = scmp.ne.s32.totalorder %s141, %s155
      %p157 = scmp.eq.s32.totalorder %s21, 0
      %p158 = por %p156, %p157
      %s160 = sadd.s32 %s159, 1
      %p163 = scmp.eq.s32.totalorder %s15, 2
      %p164 = scmp.ne.s32.totalorder %s159, %s161
      %p165 = scmp.eq.s32.totalorder %s15, 0
      %p166 = por %p164, %p165
      %p167 = scmp.ne.s32.totalorder %s159, %s161
      %p168 = scmp.eq.s32.totalorder %s20, 2
      %p169 = por %p167, %p168
      %p170 = scmp.ne.s32.totalorder %s161, %s162
      %p171 = scmp.eq.s32.totalorder %s20, 0
      %p172 = por %p170, %p171
      %p173 = scmp.ne.s32.totalorder %s161, %s162
      %p174 = scmp.eq.s32.totalorder %s21, 2
      %p175 = por %p173, %p174
      %p177 = scmp.ne.s32.totalorder %s162, %s176
      %p178 = scmp.eq.s32.totalorder %s21, 0
      %p179 = por %p177, %p178
      %s181 = sadd.s32 %s180, 1
      %p184 = scmp.eq.s32.totalorder %s15, 2
      %p185 = scmp.ne.s32.totalorder %s180, %s182
      %p186 = scmp.eq.s32.totalorder %s15, 0
      %p187 = por %p185, %p186
      %p188 = scmp.ne.s32.totalorder %s180, %s182
      %p189 = scmp.eq.s32.totalorder %s20, 2
      %p190 = por %p188, %p189
      %p191 = scmp.ne.s32.totalorder %s182, %s183
      %p192 = scmp.eq.s32.totalorder %s20, 0
      %p193 = por %p191, %p192
      %p194 = scmp.ne.s32.totalorder %s182, %s183
      %p195 = scmp.eq.s32.totalorder %s21, 2
      %p196 = por %p194, %p195
      %p198 = scmp.ne.s32.totalorder %s183, %s197
      %p199 = scmp.eq.s32.totalorder %s21, 0
      %p200 = por %p198, %p199
      %p201 = scmp.le.s32.totalorder 1, %s15
      %p202 = scmp.lt.s32.totalorder %s15, 4
      %p203 = pnand %p201, %p202
      %p204 = pneg %p203
      // Predicated region
      $region9: #{tpu_custom_call.1} parent=5 // pred_check
        _
      $region10: #{tpu_custom_call.1} parent=5 // pred_check_branch
        %206 = sbr.rel (%p203) target = $region12
      $region11: #{tpu_custom_call.1} parent=5 // pred_region
        %s207 = ssub.s32 %s15, 1
        // Predicated region
        $region13: #{tpu_custom_call.1} parent=11 // pred_check
          %p208 = pneg %p62
        $region14: #{tpu_custom_call.1} parent=11 // pred_check_branch
          %210 = sbr.rel (%p208) target = $region16
        $region15: #{tpu_custom_call.1} parent=11 // pred_region
          _
        $region16: #{tpu_custom_call.1} parent=11 // pred_fallthru
          _
        // Predicated region
        $region17: #{tpu_custom_call.1} parent=11 // pred_check
          %p211 = pneg %p83
        $region18: #{tpu_custom_call.1} parent=11 // pred_check_branch
          %213 = sbr.rel (%p211) target = $region20
        $region19: #{tpu_custom_call.1} parent=11 // pred_region
          _
        $region20: #{tpu_custom_call.1} parent=11 // pred_fallthru
          _
        // Predicated region
        $region21: #{tpu_custom_call.1} parent=11 // pred_check
          %p214 = pneg %p130
        $region22: #{tpu_custom_call.1} parent=11 // pred_check_branch
          %216 = sbr.rel (%p214) target = $region24
        $region23: #{tpu_custom_call.1} parent=11 // pred_region
          _
        $region24: #{tpu_custom_call.1} parent=11 // pred_fallthru
          _
        // Predicated region
        $region25: #{tpu_custom_call.1} parent=11 // pred_check
          %p217 = pneg %p151
        $region26: #{tpu_custom_call.1} parent=11 // pred_check_branch
          %219 = sbr.rel (%p217) target = $region28
        $region27: #{tpu_custom_call.1} parent=11 // pred_region
          _
        $region28: #{tpu_custom_call.1} parent=11 // pred_fallthru
          _
        // Predicated region
        $region29: #{tpu_custom_call.1} parent=11 // pred_check
          %p220 = pneg %p172
        $region30: #{tpu_custom_call.1} parent=11 // pred_check_branch
          %222 = sbr.rel (%p220) target = $region32
        $region31: #{tpu_custom_call.1} parent=11 // pred_region
          _
        $region32: #{tpu_custom_call.1} parent=11 // pred_fallthru
          _
      $region12: #{tpu_custom_call.1} parent=5 // pred_fallthru
        _
      %p223 = scmp.lt.s32.totalorder %s15, 3
      // Predicated region
      $region33: #{tpu_custom_call.1} parent=5 // pred_check
        %p224 = pneg %p223
      $region34: #{tpu_custom_call.1} parent=5 // pred_check_branch
        %226 = sbr.rel (%p224) target = $region36
      $region35: #{tpu_custom_call.1} parent=5 // pred_region
        // Predicated region
        $region37: #{tpu_custom_call.1} parent=35 // pred_check
          %p227 = pneg %p35
        $region38: #{tpu_custom_call.1} parent=35 // pred_check_branch
          %229 = sbr.rel (%p227) target = $region40
        $region39: #{tpu_custom_call.1} parent=35 // pred_region
          %s230 = smul.u32 16, %s15
          %p231 = scmp.lt.s32.totalorder %s230, 47
          %s232 = scalar_select %p231, %s230, 47
          %s233 = smul.addr %s232, 4
          %s234 = scalar_lea.vmem %s0, %s233
          %s235 = smul.u32 16, %s15
        $region40: #{tpu_custom_call.1} parent=35 // pred_fallthru
          _
        // Predicated region
        $region41: #{tpu_custom_call.1} parent=35 // pred_check
          %p236 = pneg %p103
        $region42: #{tpu_custom_call.1} parent=35 // pred_check_branch
          %238 = sbr.rel (%p236) target = $region44
        $region43: #{tpu_custom_call.1} parent=35 // pred_region
          %p239 = scmp.lt.s32.totalorder %s15, 2
          %s240 = scalar_select %p239, %s15, 2
          %s241 = scalar_lea.vmem %s3, %s240
        $region44: #{tpu_custom_call.1} parent=35 // pred_fallthru
          _
      $region36: #{tpu_custom_call.1} parent=5 // pred_fallthru
        _
      %p242 = scmp.le.s32.totalorder 1, %s15
      %p243 = scmp.lt.s32.totalorder %s15, 4
      %p244 = pnand %p242, %p243
      %p245 = pneg %p244
      // Predicated region
      $region45: #{tpu_custom_call.1} parent=5 // pred_check
        _
      $region46: #{tpu_custom_call.1} parent=5 // pred_check_branch
        %247 = sbr.rel (%p244) target = $region48
      $region47: #{tpu_custom_call.1} parent=5 // pred_region
        %s248 = ssub.s32 %s15, 1
        %s249 = smul.u32 16, %s20
        %p250 = scmp.lt.s32.totalorder %s249, 47
        %s251 = scalar_select %p250, %s249, 47
        %s252 = smul.addr %s251, 4
        %s253 = scalar_lea.vmem %s0, %s252
        %p254 = pneg %p41
        %p255 = pneg %p38
        %p256 = pneg %p62
        %p257 = pneg %p59
        %p258 = pneg %p83
        %p259 = pneg %p80
        %p260 = scmp.lt.s32.totalorder %s20, 2
        %s261 = scalar_select %p260, %s20, 2
        %s262 = scalar_lea.vmem %s3, %s261
        %p263 = pneg %p109
        %p264 = pneg %p106
        %p265 = pneg %p130
        %p266 = pneg %p127
        %p267 = pneg %p151
        %p268 = pneg %p148
        %p269 = pneg %p172
        %p270 = pneg %p169
        %p271 = pneg %p193
        %p272 = pneg %p190
        %s273 = smul.u32 16, %s20
        %p274 = scmp.lt.s32.totalorder %s273, 47
        %s275 = scalar_select %p274, %s273, 47
        %s276 = smul.addr %s275, 4
        %s277 = scalar_lea.vmem %s0, %s276
        %s278 = smul.u32 16, %s20
        %p279 = scmp.lt.s32.totalorder %s20, 2
        %s280 = scalar_select %p279, %s20, 2
        %s281 = scalar_lea.vmem %s3, %s280
        %p283 = scmp.eq.s32.totalorder %s20, 0
        // Predicated region
        $region49: #{tpu_custom_call.1} parent=47 // pred_check
          %p284 = pneg %p283
        $region50: #{tpu_custom_call.1} parent=47 // pred_check_branch
          %286 = sbr.rel (%p284) target = $region52
        $region51: #{tpu_custom_call.1} parent=47 // pred_region
          %287 = vst [vmem:[#allocation2] sm:$0xff] 0.0
        $region52: #{tpu_custom_call.1} parent=47 // pred_fallthru
          _
        %v288 = vld [vmem:[%s277] sm:$0xf]
        %v289 = vld [vmem:[%s277 + $0x4] sm:$0xf]
        %v290 = vld [vmem:[%s277 + $0x8] sm:$0xf]
        %v291 = vld [vmem:[%s277 + $0xc] sm:$0xf]
        %v292 = vld [vmem:[%s277 + $0x10] sm:$0xf]
        %v293 = vld [vmem:[%s277 + $0x14] sm:$0xf]
        %v294 = vld [vmem:[%s277 + $0x18] sm:$0xf]
        %v295 = vld [vmem:[%s277 + $0x1c] sm:$0xf]
        %v296 = vld [vmem:[%s277 + $0x20] sm:$0xf]
        %v297 = vld [vmem:[%s277 + $0x24] sm:$0xf]
        %v298 = vld [vmem:[%s277 + $0x28] sm:$0xf]
        %v299 = vld [vmem:[%s277 + $0x2c] sm:$0xf]
        %v300 = vld [vmem:[%s277 + $0x30] sm:$0xf]
        %v301 = vld [vmem:[%s277 + $0x34] sm:$0xf]
        %v302 = vld [vmem:[%s277 + $0x38] sm:$0xf]
        %v303 = vld [vmem:[%s277 + $0x3c] sm:$0xf]
        %v304 = vld [vmem:[%s1] sm:$0xf]
        %v305 = vld [vmem:[%s1 + $0x4] sm:$0xf]
        %v306 = vld [vmem:[%s2] sm:$0x1]
        %v308 = vlaneseq
        %v309 = vshrl.u32 %v308, 7
        %v310 = vsub.s32 0, %v309
        %v311 = vrot.slane %v306, %v310
        %v329 = vunpack.c.l.b16 %v288
        %v330 = vunpack.c.l.b16 %v289
        %v331 = vunpack.c.l.b16 %v290
        %v332 = vunpack.c.l.b16 %v291
        %v333 = vunpack.c.l.b16 %v292
        %v334 = vunpack.c.l.b16 %v293
        %v335 = vunpack.c.l.b16 %v294
        %v336 = vunpack.c.l.b16 %v295
        %v337 = vunpack.c.l.b16 %v296
        %v338 = vunpack.c.l.b16 %v297
        %v339 = vunpack.c.l.b16 %v298
        %v340 = vunpack.c.l.b16 %v299
        %v341 = vunpack.c.l.b16 %v300
        %v342 = vunpack.c.l.b16 %v301
        %v343 = vunpack.c.l.b16 %v302
        %v344 = vunpack.c.l.b16 %v303
        %v345 = vpack.c.b16 %v330, %v329
        %v346 = vpack.c.b16 %v332, %v331
        %v347 = vpack.c.b16 %v334, %v333
        %v348 = vpack.c.b16 %v336, %v335
        %v349 = vpack.c.b16 %v338, %v337
        %v350 = vpack.c.b16 %v340, %v339
        %v351 = vpack.c.b16 %v342, %v341
        %v352 = vpack.c.b16 %v344, %v343
        %v355 = vunpack.c.l.b16 %v304
        %v356 = vunpack.c.l.b16 %v305
        %v357 = vpack.c.b16 %v356, %v355
        %vm359 = vcmask 130048
        %v361 = vsel %vm359, %v345, 0
        %v364 = vsel %vm359, %v346, 0
        %v367 = vsel %vm359, %v347, 0
        %v370 = vsel %vm359, %v348, 0
        %v373 = vsel %vm359, %v349, 0
        %v376 = vsel %vm359, %v350, 0
        %v379 = vsel %vm359, %v351, 0
        %v382 = vsel %vm359, %v352, 0
        %384 = vmatprep.subr.bf16.mxu0 0
        %385 = vmatpush1.bf16.msra.mxu0 0
        %386 = vmatprep.subr.bf16.mxu0 0
        %387 = vmatpush1.bf16.msra.mxu0 0
        %388 = vmatprep.subr.bf16.mxu0 0
        %389 = vmatpush1.bf16.msra.mxu0 0
        %390 = vmatprep.subr.bf16.mxu0 0
        %391 = vmatpush1.bf16.msra.mxu0 0
        %392 = vmatprep.subr.bf16.mxu0 0
        %393 = vmatpush1.bf16.msra.mxu0 0
        %394 = vmatprep.subr.bf16.mxu0 0
        %395 = vmatpush1.bf16.msra.mxu0 0
        %396 = vmatprep.subr.bf16.mxu0 0
        %397 = vmatpush1.bf16.msra.mxu0 0
        %398 = vmatprep.subr.bf16.mxu0 0
        %399 = vmatpush1.bf16.msra.mxu0 %v357
        %400 = vmatprep.subr.bf16.mxu0 0
        %401 = vmatpush2.bf16.msra.mxu0 0
        %402 = vmatprep.subr.bf16.mxu0 0
        %403 = vmatpush2.bf16.msra.mxu0 0
        %404 = vmatprep.subr.bf16.mxu0 0
        %405 = vmatpush2.bf16.msra.mxu0 0
        %406 = vmatprep.subr.bf16.mxu0 0
        %407 = vmatpush2.bf16.msra.mxu0 0
        %408 = vmatprep.subr.bf16.mxu0 0
        %409 = vmatpush2.bf16.msra.mxu0 0
        %410 = vmatprep.subr.bf16.mxu0 0
        %411 = vmatpush2.bf16.msra.mxu0 0
        %412 = vmatprep.subr.bf16.mxu0 0
        %413 = vmatpush2.bf16.msra.mxu0 0
        %414 = vmatprep.subr.bf16.mxu0 0
        %415 = vmatpush2.bf16.msra.mxu0 0
        %416 = vmatprep.mubr.bf16.mxu0 0
        %417 = vmatmul.mubr.bf16.gmra.mxu0 %v361
        %v418 = vpop.f32.mrf.mxu0
        %v419 = vadd.f32 %v311, %v418
        %v420 = vpop.f32.mrf.mxu0
        %v421 = vpop.f32.mrf.mxu0
        %v422 = vadd.f32 %v311, %v421
        %v423 = vpop.f32.mrf.mxu0
        %424 = vmatprep.mubr.bf16.mxu0 0
        %425 = vmatmul.mubr.bf16.gmra.mxu0 %v364
        %v426 = vpop.f32.mrf.mxu0
        %v427 = vadd.f32 %v311, %v426
        %v428 = vpop.f32.mrf.mxu0
        %v429 = vpop.f32.mrf.mxu0
        %v430 = vadd.f32 %v311, %v429
        %v431 = vpop.f32.mrf.mxu0
        %432 = vmatprep.mubr.bf16.mxu0 0
        %433 = vmatmul.mubr.bf16.gmra.mxu0 %v367
        %v434 = vpop.f32.mrf.mxu0
        %v435 = vadd.f32 %v311, %v434
        %v436 = vpop.f32.mrf.mxu0
        %v437 = vpop.f32.mrf.mxu0
        %v438 = vadd.f32 %v311, %v437
        %v439 = vpop.f32.mrf.mxu0
        %440 = vmatprep.mubr.bf16.mxu0 0
        %441 = vmatmul.mubr.bf16.gmra.mxu0 %v370
        %v442 = vpop.f32.mrf.mxu0
        %v443 = vadd.f32 %v311, %v442
        %v444 = vpop.f32.mrf.mxu0
        %v445 = vpop.f32.mrf.mxu0
        %v446 = vadd.f32 %v311, %v445
        %v447 = vpop.f32.mrf.mxu0
        %448 = vmatprep.mubr.bf16.mxu0 0
        %449 = vmatmul.mubr.bf16.gmra.mxu0 %v373
        %v450 = vpop.f32.mrf.mxu0
        %v451 = vadd.f32 %v311, %v450
        %v452 = vpop.f32.mrf.mxu0
        %v453 = vpop.f32.mrf.mxu0
        %v454 = vadd.f32 %v311, %v453
        %v455 = vpop.f32.mrf.mxu0
        %456 = vmatprep.mubr.bf16.mxu0 0
        %457 = vmatmul.mubr.bf16.gmra.mxu0 %v376
        %v458 = vpop.f32.mrf.mxu0
        %v459 = vadd.f32 %v311, %v458
        %v460 = vpop.f32.mrf.mxu0
        %v461 = vpop.f32.mrf.mxu0
        %v462 = vadd.f32 %v311, %v461
        %v463 = vpop.f32.mrf.mxu0
        %464 = vmatprep.mubr.bf16.mxu0 0
        %465 = vmatmul.mubr.bf16.gmra.mxu0 %v379
        %v466 = vpop.f32.mrf.mxu0
        %v467 = vadd.f32 %v311, %v466
        %v468 = vpop.f32.mrf.mxu0
        %v469 = vpop.f32.mrf.mxu0
        %v470 = vadd.f32 %v311, %v469
        %v471 = vpop.f32.mrf.mxu0
        %472 = vmatprep.mubr.bf16.mxu0 0
        %473 = vmatmul.mubr.bf16.gmra.mxu0 %v382
        %v474 = vpop.f32.mrf.mxu0
        %v475 = vadd.f32 %v311, %v474
        %v476 = vpop.f32.mrf.mxu0
        %v477 = vpop.f32.mrf.mxu0
        %v478 = vadd.f32 %v311, %v477
        %v479 = vpop.f32.mrf.mxu0
        %480 = vdwg.mxu0
        %v481 = vmax.f32 %v419, 0.0
        %v482 = vmax.f32 %v422, 0.0
        %v483 = vmax.f32 %v427, 0.0
        %v484 = vmax.f32 %v430, 0.0
        %v485 = vmax.f32 %v435, 0.0
        %v486 = vmax.f32 %v438, 0.0
        %v487 = vmax.f32 %v443, 0.0
        %v488 = vmax.f32 %v446, 0.0
        %v489 = vmax.f32 %v451, 0.0
        %v490 = vmax.f32 %v454, 0.0
        %v491 = vmax.f32 %v459, 0.0
        %v492 = vmax.f32 %v462, 0.0
        %v493 = vmax.f32 %v467, 0.0
        %v494 = vmax.f32 %v470, 0.0
        %v495 = vmax.f32 %v475, 0.0
        %v496 = vmax.f32 %v478, 0.0
        %v497 = vld [vmem:[%s4] sm:$0xff]
        %v498 = vld [vmem:[%s4 + $0x8] sm:$0xff]
        %v499 = vld [vmem:[%s4 + $0x10] sm:$0xff]
        %v500 = vld [vmem:[%s4 + $0x18] sm:$0xff]
        %vm501 = vcmask 261120
        %v503 = vsel %vm501, %v481, 0
        %v506 = vsel %vm501, %v482, 0
        %v509 = vsel %vm501, %v483, 0
        %v512 = vsel %vm501, %v484, 0
        %v515 = vsel %vm501, %v485, 0
        %v518 = vsel %vm501, %v486, 0
        %v521 = vsel %vm501, %v487, 0
        %v524 = vsel %vm501, %v488, 0
        %v527 = vsel %vm501, %v489, 0
        %v530 = vsel %vm501, %v490, 0
        %v533 = vsel %vm501, %v491, 0
        %v536 = vsel %vm501, %v492, 0
        %v539 = vsel %vm501, %v493, 0
        %v542 = vsel %vm501, %v494, 0
        %v545 = vsel %vm501, %v495, 0
        %v548 = vsel %vm501, %v496, 0
        %550 = vmatprep.subr.mxu0 0.0
        %551 = vmatpush1.msra.mxu0 0.0
        %552 = vmatprep.subr.mxu0 0.0
        %553 = vmatpush1.msra.mxu0 0.0
        %554 = vmatprep.subr.mxu0 0.0
        %555 = vmatpush1.msra.mxu0 0.0
        %556 = vmatprep.subr.mxu0 0.0
        %557 = vmatpush1.msra.mxu0 0.0
        %558 = vmatprep.subr.mxu0 0.0
        %559 = vmatpush1.msra.mxu0 0.0
        %560 = vmatprep.subr.mxu0 0.0
        %561 = vmatpush1.msra.mxu0 0.0
        %562 = vmatprep.subr.mxu0 0.0
        %563 = vmatpush1.msra.mxu0 0.0
        %564 = vmatprep.subr.mxu0 0.0
        %565 = vmatpush1.msra.mxu0 0.0
        %566 = vmatprep.subr.mxu0 0.0
        %567 = vmatpush1.msra.mxu0 0.0
        %568 = vmatprep.subr.mxu0 0.0
        %569 = vmatpush1.msra.mxu0 0.0
        %570 = vmatprep.subr.mxu0 0.0
        %571 = vmatpush1.msra.mxu0 0.0
        %572 = vmatprep.subr.mxu0 0.0
        %573 = vmatpush1.msra.mxu0 0.0
        %574 = vmatprep.subr.mxu0 0.0
        %575 = vmatpush1.msra.mxu0 %v500
        %576 = vmatprep.subr.mxu0 0.0
        %577 = vmatpush1.msra.mxu0 %v499
        %578 = vmatprep.subr.mxu0 0.0
        %579 = vmatpush1.msra.mxu0 %v498
        %580 = vmatprep.subr.mxu0 0.0
        %581 = vmatpush1.msra.mxu0 %v497
        %582 = vmatprep.subr.mxu0 0.0
        %583 = vmatpush2.msra.mxu0 0.0
        %584 = vmatprep.subr.mxu0 0.0
        %585 = vmatpush2.msra.mxu0 0.0
        %586 = vmatprep.subr.mxu0 0.0
        %587 = vmatpush2.msra.mxu0 0.0
        %588 = vmatprep.subr.mxu0 0.0
        %589 = vmatpush2.msra.mxu0 0.0
        %590 = vmatprep.subr.mxu0 0.0
        %591 = vmatpush2.msra.mxu0 0.0
        %592 = vmatprep.subr.mxu0 0.0
        %593 = vmatpush2.msra.mxu0 0.0
        %594 = vmatprep.subr.mxu0 0.0
        %595 = vmatpush2.msra.mxu0 0.0
        %596 = vmatprep.subr.mxu0 0.0
        %597 = vmatpush2.msra.mxu0 0.0
        %598 = vmatprep.subr.mxu0 0.0
        %599 = vmatpush2.msra.mxu0 0.0
        %600 = vmatprep.subr.mxu0 0.0
        %601 = vmatpush2.msra.mxu0 0.0
        %602 = vmatprep.subr.mxu0 0.0
        %603 = vmatpush2.msra.mxu0 0.0
        %604 = vmatprep.subr.mxu0 0.0
        %605 = vmatpush2.msra.mxu0 0.0
        %606 = vmatprep.subr.mxu0 0.0
        %607 = vmatpush2.msra.mxu0 0.0
        %608 = vmatprep.subr.mxu0 0.0
        %609 = vmatpush2.msra.mxu0 0.0
        %610 = vmatprep.subr.mxu0 0.0
        %611 = vmatpush2.msra.mxu0 0.0
        %612 = vmatprep.subr.mxu0 0.0
        %613 = vmatpush2.msra.mxu0 0.0
        %614 = vmatprep.mubr.f32.mxu0 0.0
        %615 = vmatmul.mubr.f32.gmra.mxu0 %v503
        %v616 = vpop.f32.mrf.mxu0
        %v617 = vadd.f32 0.0, %v616
        %v618 = vpop.f32.mrf.mxu0
        %619 = vmatprep.mubr.f32.mxu0 0.0
        %620 = vmatmul.mubr.f32.gmra.mxu0 %v506
        %v621 = vpop.f32.mrf.mxu0
        %v622 = vadd.f32 0.0, %v621
        %v623 = vpop.f32.mrf.mxu0
        %624 = vmatprep.mubr.f32.mxu0 0.0
        %625 = vmatmul.mubr.f32.gmra.mxu0 %v509
        %v626 = vpop.f32.mrf.mxu0
        %v627 = vadd.f32 0.0, %v626
        %v628 = vpop.f32.mrf.mxu0
        %629 = vmatprep.mubr.f32.mxu0 0.0
        %630 = vmatmul.mubr.f32.gmra.mxu0 %v512
        %v631 = vpop.f32.mrf.mxu0
        %v632 = vadd.f32 0.0, %v631
        %v633 = vpop.f32.mrf.mxu0
        %634 = vmatprep.mubr.f32.mxu0 0.0
        %635 = vmatmul.mubr.f32.gmra.mxu0 %v515
        %v636 = vpop.f32.mrf.mxu0
        %v637 = vadd.f32 0.0, %v636
        %v638 = vpop.f32.mrf.mxu0
        %639 = vmatprep.mubr.f32.mxu0 0.0
        %640 = vmatmul.mubr.f32.gmra.mxu0 %v518
        %v641 = vpop.f32.mrf.mxu0
        %v642 = vadd.f32 0.0, %v641
        %v643 = vpop.f32.mrf.mxu0
        %644 = vmatprep.mubr.f32.mxu0 0.0
        %645 = vmatmul.mubr.f32.gmra.mxu0 %v521
        %v646 = vpop.f32.mrf.mxu0
        %v647 = vadd.f32 0.0, %v646
        %v648 = vpop.f32.mrf.mxu0
        %649 = vmatprep.mubr.f32.mxu0 0.0
        %650 = vmatmul.mubr.f32.gmra.mxu0 %v524
        %v651 = vpop.f32.mrf.mxu0
        %v652 = vadd.f32 0.0, %v651
        %v653 = vpop.f32.mrf.mxu0
        %654 = vmatprep.mubr.f32.mxu0 0.0
        %655 = vmatmul.mubr.f32.gmra.mxu0 %v527
        %v656 = vpop.f32.mrf.mxu0
        %v657 = vadd.f32 0.0, %v656
        %v658 = vpop.f32.mrf.mxu0
        %659 = vmatprep.mubr.f32.mxu0 0.0
        %660 = vmatmul.mubr.f32.gmra.mxu0 %v530
        %v661 = vpop.f32.mrf.mxu0
        %v662 = vadd.f32 0.0, %v661
        %v663 = vpop.f32.mrf.mxu0
        %664 = vmatprep.mubr.f32.mxu0 0.0
        %665 = vmatmul.mubr.f32.gmra.mxu0 %v533
        %v666 = vpop.f32.mrf.mxu0
        %v667 = vadd.f32 0.0, %v666
        %v668 = vpop.f32.mrf.mxu0
        %669 = vmatprep.mubr.f32.mxu0 0.0
        %670 = vmatmul.mubr.f32.gmra.mxu0 %v536
        %v671 = vpop.f32.mrf.mxu0
        %v672 = vadd.f32 0.0, %v671
        %v673 = vpop.f32.mrf.mxu0
        %674 = vmatprep.mubr.f32.mxu0 0.0
        %675 = vmatmul.mubr.f32.gmra.mxu0 %v539
        %v676 = vpop.f32.mrf.mxu0
        %v677 = vadd.f32 0.0, %v676
        %v678 = vpop.f32.mrf.mxu0
        %679 = vmatprep.mubr.f32.mxu0 0.0
        %680 = vmatmul.mubr.f32.gmra.mxu0 %v542
        %v681 = vpop.f32.mrf.mxu0
        %v682 = vadd.f32 0.0, %v681
        %v683 = vpop.f32.mrf.mxu0
        %684 = vmatprep.mubr.f32.mxu0 0.0
        %685 = vmatmul.mubr.f32.gmra.mxu0 %v545
        %v686 = vpop.f32.mrf.mxu0
        %v687 = vadd.f32 0.0, %v686
        %v688 = vpop.f32.mrf.mxu0
        %689 = vmatprep.mubr.f32.mxu0 0.0
        %690 = vmatmul.mubr.f32.gmra.mxu0 %v548
        %v691 = vpop.f32.mrf.mxu0
        %v692 = vadd.f32 0.0, %v691
        %v693 = vpop.f32.mrf.mxu0
        %694 = vdwg.mxu0
        %v695 = vlaneseq
        %v696 = vshrl.u32 %v695, 7
        %v697 = vld [vmem:[%s281] sm:$0x1]
        %v698 = vlaneseq
        %v699 = vshrl.u32 %v698, 7
        %v700 = vsub.s32 0, %v699
        %v701 = vrot.slane %v697, %v700
        %vm702 = vcmp.eq.s32.totalorder %v696, %v701
        %v703 = vsel %vm702, 1, 0
        %v704 = vcvt.s32.f32 %v703
        %705 = vmatprep.subr.mxu0 0.0
        %706 = vmatpush1.msra.mxu0 %v692
        %707 = vmatprep.subr.mxu0 0.0
        %708 = vmatpush1.msra.mxu0 %v687
        %709 = vmatprep.subr.mxu0 0.0
        %710 = vmatpush1.msra.mxu0 %v682
        %711 = vmatprep.subr.mxu0 0.0
        %712 = vmatpush1.msra.mxu0 %v677
        %713 = vmatprep.subr.mxu0 0.0
        %714 = vmatpush1.msra.mxu0 %v672
        %715 = vmatprep.subr.mxu0 0.0
        %716 = vmatpush1.msra.mxu0 %v667
        %717 = vmatprep.subr.mxu0 0.0
        %718 = vmatpush1.msra.mxu0 %v662
        %719 = vmatprep.subr.mxu0 0.0
        %720 = vmatpush1.msra.mxu0 %v657
        %721 = vmatprep.subr.mxu0 0.0
        %722 = vmatpush1.msra.mxu0 %v652
        %723 = vmatprep.subr.mxu0 0.0
        %724 = vmatpush1.msra.mxu0 %v647
        %725 = vmatprep.subr.mxu0 0.0
        %726 = vmatpush1.msra.mxu0 %v642
        %727 = vmatprep.subr.mxu0 0.0
        %728 = vmatpush1.msra.mxu0 %v637
        %729 = vmatprep.subr.mxu0 0.0
        %730 = vmatpush1.msra.mxu0 %v632
        %731 = vmatprep.subr.mxu0 0.0
        %732 = vmatpush1.msra.mxu0 %v627
        %733 = vmatprep.subr.mxu0 0.0
        %734 = vmatpush1.msra.mxu0 %v622
        %735 = vmatprep.subr.mxu0 0.0
        %736 = vmatpush1.msra.mxu0 %v617
        %737 = vmatprep.subr.mxu0 0.0
        %738 = vmatpush2.msra.mxu0 0.0
        %739 = vmatprep.subr.mxu0 0.0
        %740 = vmatpush2.msra.mxu0 0.0
        %741 = vmatprep.subr.mxu0 0.0
        %742 = vmatpush2.msra.mxu0 0.0
        %743 = vmatprep.subr.mxu0 0.0
        %744 = vmatpush2.msra.mxu0 0.0
        %745 = vmatprep.subr.mxu0 0.0
        %746 = vmatpush2.msra.mxu0 0.0
        %747 = vmatprep.subr.mxu0 0.0
        %748 = vmatpush2.msra.mxu0 0.0
        %749 = vmatprep.subr.mxu0 0.0
        %750 = vmatpush2.msra.mxu0 0.0
        %751 = vmatprep.subr.mxu0 0.0
        %752 = vmatpush2.msra.mxu0 0.0
        %753 = vmatprep.subr.mxu0 0.0
        %754 = vmatpush2.msra.mxu0 0.0
        %755 = vmatprep.subr.mxu0 0.0
        %756 = vmatpush2.msra.mxu0 0.0
        %757 = vmatprep.subr.mxu0 0.0
        %758 = vmatpush2.msra.mxu0 0.0
        %759 = vmatprep.subr.mxu0 0.0
        %760 = vmatpush2.msra.mxu0 0.0
        %761 = vmatprep.subr.mxu0 0.0
        %762 = vmatpush2.msra.mxu0 0.0
        %763 = vmatprep.subr.mxu0 0.0
        %764 = vmatpush2.msra.mxu0 0.0
        %765 = vmatprep.subr.mxu0 0.0
        %766 = vmatpush2.msra.mxu0 0.0
        %767 = vmatprep.subr.mxu0 0.0
        %768 = vmatpush2.msra.mxu0 0.0
        %769 = vmatprep.mubr.f32.mxu0 0.0
        %770 = vmatmul.mubr.f32.gmra.mxu0 %v704
        %v771 = vpop.f32.mrf.mxu0
        %v772 = vadd.f32 0.0, %v771
        %v773 = vpop.f32.mrf.mxu0
        %774 = vdwg.mxu0
        %v775 = vld [vmem:[#allocation2] sm:$0xff]
        %777 = vset.pattern.permute.xlu0 0
        %778 = vperm.xlu0 %777, %v772
        %v779 = vpop.permute.xlu0 %778
        %v781 = vadd.f32 %v775, %v779
        %782 = vst [vmem:[#allocation2] sm:$0xff] %v781
        %p783 = scmp.eq.s32.totalorder %s20, 2
        // Predicated region
        $region53: #{tpu_custom_call.1} parent=47 // pred_check
          %p784 = pneg %p783
        $region54: #{tpu_custom_call.1} parent=47 // pred_check_branch
          %786 = sbr.rel (%p784) target = $region56
        $region55: #{tpu_custom_call.1} parent=47 // pred_region
          %v787 = vld [vmem:[#allocation2] sm:$0xff]
          %v788 = vld [vmem:[%s5] sm:$0xff]
          %790 = vset.pattern.permute.xlu0 0
          %791 = vperm.xlu0 %790, %v788
          %v792 = vpop.permute.xlu0 %791
          %v794 = vmul.f32 %v787, %v792
          %s795 = sld [smem:[#allocation3]]
          %v796 = vstv %s795
          %v797 = vadd.f32 %v794, %v796
          %v798 = vsub.f32 0.0, %v797
          %v799 = vmul.f32 %v798, 1.442695
          %v800 = vpow.pop %v799
          %v801 = vadd.f32 %v800, 1.0
          %v802 = vrcp.pop %v801
          %803 = vst [vmem:[#allocation4] sm:$0xff] %v802
        $region56: #{tpu_custom_call.1} parent=47 // pred_fallthru
          _
        // Predicated region
        $region57: #{tpu_custom_call.1} parent=47 // pred_check
          %p804 = pneg %p190
        $region58: #{tpu_custom_call.1} parent=47 // pred_check_branch
          %806 = sbr.rel (%p804) target = $region60
        $region59: #{tpu_custom_call.1} parent=47 // pred_region
          %s808 = ssub.s32 128, 128
          %809 = vsyncadd [#allocation5], %s808
          %s811 = sshll.u32 [#allocation4], 4
          %s812 = int_to_ptr.vmem [resolvable:$true] %s811
          %814 = dma.vmem_to_hbm [thread:$0]  %s812, 128, %s7, [#allocation5]
        $region60: #{tpu_custom_call.1} parent=47 // pred_fallthru
          _
        // Predicated region
        $region61: #{tpu_custom_call.1} parent=47 // pred_check
          %p815 = pneg %p190
        $region62: #{tpu_custom_call.1} parent=47 // pred_check_branch
          %817 = sbr.rel (%p815) target = $region64
        $region63: #{tpu_custom_call.1} parent=47 // pred_region
          %818 = dma.done [#allocation5], 128
        $region64: #{tpu_custom_call.1} parent=47 // pred_fallthru
          _
      $region48: #{tpu_custom_call.1} parent=5 // pred_fallthru
        _
      %p819 = scmp.le.s32.totalorder 2, %s15
      // Predicated region
      $region65: #{tpu_custom_call.1} parent=5 // pred_check
        %p820 = pneg %p819
      $region66: #{tpu_custom_call.1} parent=5 // pred_check_branch
        %822 = sbr.rel (%p820) target = $region68
      $region67: #{tpu_custom_call.1} parent=5 // pred_region
        %s823 = ssub.s32 %s15, 2
      $region68: #{tpu_custom_call.1} parent=5 // pred_fallthru
        _
    $region6: #{tpu_custom_call.1} parent=1 // loop_footer
      %s19 = sadd.s32 1, %s15
    $region7: #{tpu_custom_call.1} parent=1 // loop_footer_branch
      %14 = sbr.rel target = $region3
    $region8: #{tpu_custom_call.1} parent=1 // loop_exit
      _
    %824 = vsyncpa [#allocation5], 1
    %s825 = scalar_lea.sflag [#allocation5], 1
    %826 = vsyncpa %s825, 1

</llo_original>
